<compile_context>
chip_gen: v6e
topology: v6e:2x2x1
jax: 0.10.0
libtpu: 0.0.40
codegen_flags: <defaults>
</compile_context>

<pallas_src>
import functools
import math

import jax
import jax.numpy as jnp
import numpy as np
from jax.experimental import pallas as pl
from jax.experimental.pallas import tpu as pltpu


def _round_up(v, m):
    return ((v + m - 1) // m) * m


def _gfups_kernel(hs_ref, uta_ref, x_ref, out_ref, m_ref, *, K):
    # M = sum_k hs[k] * UTA[k] for the current child tile.  The channel grid
    # axis is innermost ("arbitrary"), so compute M only once per child tile.
    @pl.when(pl.program_id(1) == 0)
    def _():
        m = hs_ref[0] * uta_ref[0]           # f32 tap * tile -> f32 accumulation
        for k in range(1, K):                # K is small & static -> unrolled VPU FMAs
            m = m + hs_ref[k] * uta_ref[k]
        m_ref[...] = m.astype(m_ref.dtype)   # stored at MXU input precision

    # out_tile = X_tile @ M_tile on the MXU, f32 accumulation.
    out_ref[...] = jnp.dot(
        x_ref[...], m_ref[...], preferred_element_type=jnp.float32
    ).astype(out_ref.dtype)


def precompute_uta(u_t, apows):
    """UTA[k] = U_T @ A^k.  U and A are fixed module buffers -> init-time glue."""
    return jnp.einsum('pc,kcd->kpd', u_t, apows)


@functools.partial(jax.jit, static_argnames=("mxu_dtype",))
def gfups_forward(x, hs, uta, *, mxu_dtype=jnp.bfloat16):
    """x: (1, C, parent); hs: (K,); uta: (K, parent, child) = U_T @ A^k."""
    assert x.shape[0] == 1, 'Number of input samples must be 1'
    n_channels = x.shape[1]
    K, parent_size, child_size = uta.shape
    out_dtype = x.dtype
    isz = jnp.dtype(mxu_dtype).itemsize
    out_isz = jnp.dtype(out_dtype).itemsize

    # ---- tile sizes -------------------------------------------------------
    # Child (lane) tile: multiple of 128, capped so the double-buffered UTA
    # tile stays well inside the v7x scoped-VMEM budget.
    tn = min(512, _round_up(child_size, 128))
    while tn > 128 and 2 * K * parent_size * tn * isz > 16 * 1024 * 1024:
        tn = max(128, ((tn // 2) // 128) * 128)   # stay lane-aligned
    child_pad = _round_up(child_size, tn)
    # Channel (sublane) tile.
    tc = min(256, _round_up(n_channels, 8))
    c_pad = _round_up(n_channels, tc)

    # ---- pad to lane/sublane-aligned shapes (zeros, stripped afterwards) ---
    uta_p = jnp.pad(
        uta, ((0, 0), (0, 0), (0, child_pad - child_size))).astype(mxu_dtype)
    x_p = jnp.pad(
        x[0], ((0, c_pad - n_channels), (0, 0))).astype(mxu_dtype)
    hs_f32 = hs.astype(jnp.float32)

    grid = (child_pad // tn, c_pad // tc)   # (child tiles, channel tiles)

    # VMEM budget: double-buffered UTA/x/out tiles + the M scratch.
    vmem_need = (2 * (K * parent_size * tn + tc * parent_size) * isz
                 + 2 * tc * tn * out_isz
                 + parent_size * tn * isz
                 + (8 << 10))
    vmem_limit = int(min(max(2 * vmem_need, 8 << 20), 64 << 20))

    cost = pl.CostEstimate(
        flops=int(2 * c_pad * parent_size * child_pad
                  + 2 * K * parent_size * child_pad),
        transcendentals=0,
        bytes_accessed=int(uta_p.size * isz + x_p.size * isz
                           + c_pad * child_pad * out_isz + K * 4),
    )

    out2d = pl.pallas_call(
        functools.partial(_gfups_kernel, K=K),
        out_shape=jax.ShapeDtypeStruct((c_pad, child_pad), out_dtype),
        grid_spec=pltpu.PrefetchScalarGridSpec(
            num_scalar_prefetch=0,
            grid=grid,
            in_specs=[
                # hs taps: small scalar vector, whole array in SMEM.
                pl.BlockSpec(memory_space=pltpu.MemorySpace.SMEM),
                # UTA: (K, parent, child) -> child-tiled, streamed once per child tile.
                pl.BlockSpec((K, parent_size, tn), lambda j, i: (0, 0, j)),
                # x: (C_pad, parent) -> channel-tiled.
                pl.BlockSpec((tc, parent_size), lambda j, i: (i, 0)),
            ],
            out_specs=pl.BlockSpec((tc, tn), lambda j, i: (i, j)),
            scratch_shapes=[pltpu.VMEM((parent_size, tn), mxu_dtype)],  # M tile
        ),
        compiler_params=pltpu.CompilerParams(
            dimension_semantics=("parallel", "arbitrary"),
            vmem_limit_bytes=vmem_limit,
        ),
        cost_estimate=cost,
    )(hs_f32, uta_p, x_p)

    return out2d[:n_channels, :child_size].reshape(1, n_channels, child_size)


if __name__ == "__main__":
    # Small deterministic setup consistent with the module.
    parent_size = 8     # U.shape[1]
    child_size = 16     # U.shape[0] == N (A is N x N)
    n_channels = 4
    K = 3

    key = jax.random.PRNGKey(0)
    k_u, k_a, k_h, k_x = jax.random.split(key, 4)

    # U: (child, parent); U_T: (parent, child)
    U = jax.random.normal(k_u, (child_size, parent_size), dtype=jnp.float32)
    U_T = U.T

    # A: symmetric (child, child), scaled so powers stay bounded.
    B = jax.random.normal(k_a, (child_size, child_size), dtype=jnp.float32)
    A = (B + B.T) / (2.0 * child_size)

    # hs: K filter taps, uniform(-1/sqrt(K), 1/sqrt(K)) like the nn.Parameter init.
    stdv = 1.0 / math.sqrt(K)
    hs = jax.random.uniform(k_h, (K,), dtype=jnp.float32, minval=-stdv, maxval=stdv)

    # Apows[i] = A^i (param setup, plain JAX).
    pows = []
    Ai = jnp.eye(child_size, dtype=jnp.float32)
    for i in range(K):
        pows.append(Ai)
        Ai = Ai @ A
    Apows = jnp.stack(pows, axis=0)  # (K, child, child)

    # Input: (1, n_channels, parent_size)
    x = jax.random.normal(k_x, (1, n_channels, parent_size), dtype=jnp.float32)

    # Init-time glue (fixed buffers): UTA[k] = U_T @ A^k.
    UTA = precompute_uta(U_T, Apows)

    # bf16-MXU fast path (v6e/v7x recommendation) and f32 reference path.
    out_bf16 = jax.block_until_ready(gfups_forward(x, hs, UTA, mxu_dtype=jnp.bfloat16))
    out_f32 = jax.block_until_ready(gfups_forward(x, hs, UTA, mxu_dtype=jnp.float32))

    # Pure-JAX reference of the original PyTorch forward.
    H_ref = jnp.sum(hs[:, None, None] * Apows, axis=0)
    ref = (x[0] @ (U_T @ H_ref)).reshape(1, n_channels, child_size)

    assert out_bf16.shape == (1, n_channels, child_size)
    assert out_f32.shape == (1, n_channels, child_size)
    assert np.allclose(np.asarray(out_f32), np.asarray(ref), rtol=1e-4, atol=1e-4)
    assert np.allclose(np.asarray(out_bf16), np.asarray(ref), rtol=5e-2, atol=5e-2)

    print("KERNEL_OK")
</pallas_src>

<mosaic_0001>
module attributes {stable_mosaic.version = 11 : i64} {
  func.func @_gfups_kernel(%arg0: i32, %arg1: i32, %arg2: memref<3xf32, #tpu.memory_space<smem>>, %arg3: memref<3x8x128xbf16, #tpu.memory_space<vmem>>, %arg4: memref<8x8xbf16, #tpu.memory_space<vmem>>, %arg5: memref<8x128xf32, #tpu.memory_space<vmem>>, %arg6: memref<8x128xbf16, #tpu.memory_space<vmem>>) attributes {dimension_semantics = [#tpu.dimension_semantics<parallel>, #tpu.dimension_semantics<arbitrary>], iteration_bounds = array<i64: 1, 1>, scalar_prefetch = 0 : i64, scratch_operands = 1 : i64, tpu.core_type = #tpu.core_type<tc>, window_params = [{transform_indices = @transform_0, window_bounds = array<i64: 3>}, {transform_indices = @transform_1, window_bounds = array<i64: 3, 8, 128>}, {transform_indices = @transform_2, window_bounds = array<i64: 8, 8>}, {transform_indices = @transform_3, window_bounds = array<i64: 8, 128>}]} {
    %c0_i32 = arith.constant 0 : i32
    %0 = arith.cmpi eq, %arg1, %c0_i32 : i32
    %1 = arith.extui %0 : i1 to i32
    %c0_i32_0 = arith.constant 0 : i32
    %2 = arith.cmpi ne, %1, %c0_i32_0 : i32
    scf.if %2 {
      %c0_6 = arith.constant 0 : index
      %7 = memref.load %arg2[%c0_6] : memref<3xf32, #tpu.memory_space<smem>>
      %c0_7 = arith.constant 0 : index
      %c0_8 = arith.constant 0 : index
      %c0_9 = arith.constant 0 : index
      %8 = vector.load %arg3[%c0_7, %c0_8, %c0_9] : memref<3x8x128xbf16, #tpu.memory_space<vmem>>, vector<1x8x128xbf16>
      %9 = vector.shape_cast %8 : vector<1x8x128xbf16> to vector<8x128xbf16>
      %10 = arith.extf %9 : vector<8x128xbf16> to vector<8x128xf32>
      %11 = vector.broadcast %7 : f32 to vector<8x128xf32>
      %12 = arith.mulf %11, %10 : vector<8x128xf32>
      %c1 = arith.constant 1 : index
      %13 = memref.load %arg2[%c1] : memref<3xf32, #tpu.memory_space<smem>>
      %c1_10 = arith.constant 1 : index
      %c0_11 = arith.constant 0 : index
      %c0_12 = arith.constant 0 : index
      %14 = vector.load %arg3[%c1_10, %c0_11, %c0_12] : memref<3x8x128xbf16, #tpu.memory_space<vmem>>, vector<1x8x128xbf16>
      %15 = vector.shape_cast %14 : vector<1x8x128xbf16> to vector<8x128xbf16>
      %16 = arith.extf %15 : vector<8x128xbf16> to vector<8x128xf32>
      %17 = vector.broadcast %13 : f32 to vector<8x128xf32>
      %18 = arith.mulf %17, %16 : vector<8x128xf32>
      %19 = arith.addf %12, %18 : vector<8x128xf32>
      %c2 = arith.constant 2 : index
      %20 = memref.load %arg2[%c2] : memref<3xf32, #tpu.memory_space<smem>>
      %c2_13 = arith.constant 2 : index
      %c0_14 = arith.constant 0 : index
      %c0_15 = arith.constant 0 : index
      %21 = vector.load %arg3[%c2_13, %c0_14, %c0_15] : memref<3x8x128xbf16, #tpu.memory_space<vmem>>, vector<1x8x128xbf16>
      %22 = vector.shape_cast %21 : vector<1x8x128xbf16> to vector<8x128xbf16>
      %23 = arith.extf %22 : vector<8x128xbf16> to vector<8x128xf32>
      %24 = vector.broadcast %20 : f32 to vector<8x128xf32>
      %25 = arith.mulf %24, %23 : vector<8x128xf32>
      %26 = arith.addf %19, %25 : vector<8x128xf32>
      %27 = arith.truncf %26 : vector<8x128xf32> to vector<8x128xbf16>
      %c0_16 = arith.constant 0 : index
      %c0_17 = arith.constant 0 : index
      %28 = vector.load %arg6[%c0_16, %c0_17] : memref<8x128xbf16, #tpu.memory_space<vmem>>, vector<8x128xbf16>
      tpu.vector_store %arg6[%c0_16, %c0_17], %27 {strides = array<i32>} : memref<8x128xbf16, #tpu.memory_space<vmem>>, vector<8x128xbf16>,
    } else {
    }
    %c0 = arith.constant 0 : index
    %c0_1 = arith.constant 0 : index
    %3 = vector.load %arg4[%c0, %c0_1] : memref<8x8xbf16, #tpu.memory_space<vmem>>, vector<8x8xbf16>
    %c0_2 = arith.constant 0 : index
    %c0_3 = arith.constant 0 : index
    %4 = vector.load %arg6[%c0_2, %c0_3] : memref<8x128xbf16, #tpu.memory_space<vmem>>, vector<8x128xbf16>
    %cst = arith.constant dense<0.000000e+00> : vector<8x128xf32>
    %5 = tpu.matmul %3, %4, %cst {dimension_numbers = #tpu.dot_dimension_numbers<[1], [0], [0], [1], [0, 0, 1, 1], [], []>} : vector<8x8xbf16>, vector<8x128xbf16>, vector<8x128xf32> -> vector<8x128xf32>
    %c0_4 = arith.constant 0 : index
    %c0_5 = arith.constant 0 : index
    %6 = vector.load %arg5[%c0_4, %c0_5] : memref<8x128xf32, #tpu.memory_space<vmem>>, vector<8x128xf32>
    tpu.vector_store %arg5[%c0_4, %c0_5], %5 {strides = array<i32>} : memref<8x128xf32, #tpu.memory_space<vmem>>, vector<8x128xf32>,
    return
  }
  func.func @transform_0(%arg0: i32, %arg1: i32) -> i32 {
    %c0_i32 = arith.constant 0 : i32
    %c0_i32_0 = arith.constant 0 : i32
    return %c0_i32 : i32
  }
  func.func @transform_1(%arg0: i32, %arg1: i32) -> (i32, i32, i32) {
    %c0_i32 = arith.constant 0 : i32
    %c0_i32_0 = arith.constant 0 : i32
    %c0_i32_1 = arith.constant 0 : i32
    return %c0_i32, %c0_i32_0, %arg0 : i32, i32, i32
  }
  func.func @transform_2(%arg0: i32, %arg1: i32) -> (i32, i32) {
    %c0_i32 = arith.constant 0 : i32
    %c0_i32_0 = arith.constant 0 : i32
    return %arg1, %c0_i32 : i32, i32
  }
  func.func @transform_3(%arg0: i32, %arg1: i32) -> (i32, i32) {
    %c0_i32 = arith.constant 0 : i32
    return %arg1, %arg0 : i32, i32
  }
}

</mosaic_0001>

<llo_original>
// kernel: gfups_forward.1
$region0: #{gfups_forward.1}
  #allocation0 [shape = 'u32[]', space=smem, size = 0x4, offset = 0x4, fixed_abs, tag = 'smem constant byte address 0x4 - core index']
  #allocation1 [shape = 'u32[144,128]{1,0:T(1,128)}', space=vmem, size = 0x12000, scoped, tag = 'internal scratch']
  #allocation2 [shape = 'bf16[8,128]{1,0:T(8,128)(2,1)}', space=vmem, size = 0x800, scoped, tag = 'scratch operand']
  %s0 = inlined_call_operand.vmem [shape: f32[3], index: 0, kind: input, shape index: {}]
  %s1 = inlined_call_operand.vmem [shape: bf16[3,8,128], index: 1, kind: input, shape index: {}]
  %s2 = inlined_call_operand.vmem [shape: bf16[8,8], index: 2, kind: input, shape index: {}]
  %s3 = inlined_call_operand.vmem [shape: f32[8,128], index: 3, kind: output, shape index: {}]
  %s4 = sld [smem:[#allocation0]]
  $region30: #{gfups_forward.1} parent=0
    _
  %s6 = ssub.s32 1, %s4
  %s7 = scalar_select 0, %s6, %s4
  $region1: #{gfups_forward.1} parent=0
    #allocation3 [shape = 'u8[512]{0}', space=smem, size = 0x200, scoped, tag = 'input window, operand 0, single buffered']
    #allocation4 [shape = 's32[1]{0}', space=sflag, size = 0x4, scoped, tag = 'scoped memory for gfups_forward.1']
    %8 = vsyncpa [#allocation4], 0
    // Predicated region
    $region2: #{gfups_forward.1} parent=1 // pred_check
      _
    $region3: #{gfups_forward.1} parent=1 // pred_check_branch
      %10 = sbr.rel (0) target = $region5
    $region4: #{gfups_forward.1} parent=1 // pred_region
      %s12 = ssub.s32 16, 16
      %13 = vsyncadd [#allocation4], %s12
      %s15 = sshll.u32 %s0, 4
      %s16 = int_to_ptr.vmem [resolvable:$true] %s15
      %18 = dma.vmem_to_smem %s16, 16, [#allocation3], [#allocation4]
    $region5: #{gfups_forward.1} parent=1 // pred_fallthru
      _
    // Predicated region
    $region6: #{gfups_forward.1} parent=1 // pred_check
      _
    $region7: #{gfups_forward.1} parent=1 // pred_check_branch
      %20 = sbr.rel (0) target = $region9
    $region8: #{gfups_forward.1} parent=1 // pred_region
      _
    $region9: #{gfups_forward.1} parent=1 // pred_fallthru
      _
    // Predicated region
    $region10: #{gfups_forward.1} parent=1 // pred_check
      _
    $region11: #{gfups_forward.1} parent=1 // pred_check_branch
      %22 = sbr.rel (0) target = $region13
    $region12: #{gfups_forward.1} parent=1 // pred_region
      _
    $region13: #{gfups_forward.1} parent=1 // pred_fallthru
      _
    // Predicated region
    $region14: #{gfups_forward.1} parent=1 // pred_check
      _
    $region15: #{gfups_forward.1} parent=1 // pred_check_branch
      %24 = sbr.rel (0) target = $region17
    $region16: #{gfups_forward.1} parent=1 // pred_region
      %25 = dma.done [#allocation4], 16
    $region17: #{gfups_forward.1} parent=1 // pred_fallthru
      _
    %26 = sfence
    %p28 = scmp.eq.s32.totalorder 0, 0
    // Predicated region
    $region18: #{gfups_forward.1} parent=1 // pred_check
      %p29 = pneg %p28
    $region19: #{gfups_forward.1} parent=1 // pred_check_branch
      %31 = sbr.rel (%p29) target = $region21
    $region20: #{gfups_forward.1} parent=1 // pred_region
      %s32 = sld [smem:[#allocation3]]
      %v33 = vld [vmem:[%s1] sm:$0xf]
      %v34 = vunpack.c.l.bf16 %v33
      %v35 = vstv %s32
      %v36 = vmul.f32 %v35, %v34
      %s37 = sld [smem:[#allocation3 + $0x1]]
      %s38 = scalar_lea.vmem %s1, 4
      %v39 = vld [vmem:[%s38] sm:$0xf]
      %v40 = vunpack.c.l.bf16 %v39
      %v41 = vstv %s37
      %v42 = vmul.f32 %v41, %v40
      %v43 = vadd.f32 %v36, %v42
      %s44 = sld [smem:[#allocation3 + $0x2]]
      %s45 = scalar_lea.vmem %s1, 8
      %v46 = vld [vmem:[%s45] sm:$0xf]
      %v47 = vunpack.c.l.bf16 %v46
      %v48 = vstv %s44
      %v49 = vmul.f32 %v48, %v47
      %v50 = vadd.f32 %v43, %v49
      %v51 = vpack.c.bf16 %v50, %v50
      %52 = vst [vmem:[#allocation2] sm:$0xf] %v51
    $region21: #{gfups_forward.1} parent=1 // pred_fallthru
      _
    %v53 = vld [vmem:[%s2] sm:$0xf]
    %v54 = vld [vmem:[#allocation2] sm:$0xf]
    %vm55 = vcmask 64512
    %v57 = vsel %vm55, %v53, 0
    %vm59 = vcmask 1043456
    %v61 = vsel %vm59, %v54, 0
    %63 = vmatprep.subr.bf16.mxu0 0
    %64 = vmatpush1.bf16.msra.mxu0 0
    %65 = vmatprep.subr.bf16.mxu0 0
    %66 = vmatpush1.bf16.msra.mxu0 0
    %67 = vmatprep.subr.bf16.mxu0 0
    %68 = vmatpush1.bf16.msra.mxu0 0
    %69 = vmatprep.subr.bf16.mxu0 0
    %70 = vmatpush1.bf16.msra.mxu0 0
    %71 = vmatprep.subr.bf16.mxu0 0
    %72 = vmatpush1.bf16.msra.mxu0 0
    %73 = vmatprep.subr.bf16.mxu0 0
    %74 = vmatpush1.bf16.msra.mxu0 0
    %75 = vmatprep.subr.bf16.mxu0 0
    %76 = vmatpush1.bf16.msra.mxu0 0
    %77 = vmatprep.subr.bf16.mxu0 0
    %78 = vmatpush1.bf16.msra.mxu0 %v61
    %79 = vmatprep.subr.bf16.mxu0 0
    %80 = vmatpush2.bf16.msra.mxu0 0
    %81 = vmatprep.subr.bf16.mxu0 0
    %82 = vmatpush2.bf16.msra.mxu0 0
    %83 = vmatprep.subr.bf16.mxu0 0
    %84 = vmatpush2.bf16.msra.mxu0 0
    %85 = vmatprep.subr.bf16.mxu0 0
    %86 = vmatpush2.bf16.msra.mxu0 0
    %87 = vmatprep.subr.bf16.mxu0 0
    %88 = vmatpush2.bf16.msra.mxu0 0
    %89 = vmatprep.subr.bf16.mxu0 0
    %90 = vmatpush2.bf16.msra.mxu0 0
    %91 = vmatprep.subr.bf16.mxu0 0
    %92 = vmatpush2.bf16.msra.mxu0 0
    %93 = vmatprep.subr.bf16.mxu0 0
    %94 = vmatpush2.bf16.msra.mxu0 0
    %95 = vmatprep.mubr.bf16.mxu0 0
    %96 = vmatmul.mubr.bf16.gmra.mxu0 %v57
    %v97 = vpop.f32.mrf.mxu0
    %v98 = vadd.f32 0.0, %v97
    %v99 = vpop.f32.mrf.mxu0
    %v100 = vpop.f32.mrf.mxu0
    %v101 = vpop.f32.mrf.mxu0
    %102 = vdwg.mxu0
    %103 = vst [vmem:[%s3] sm:$0xff] %v98
    // Predicated region
    $region22: #{gfups_forward.1} parent=1 // pred_check
      _
    $region23: #{gfups_forward.1} parent=1 // pred_check_branch
      %105 = sbr.rel (0) target = $region25
    $region24: #{gfups_forward.1} parent=1 // pred_region
      _
    $region25: #{gfups_forward.1} parent=1 // pred_fallthru
      _
    // Predicated region
    $region26: #{gfups_forward.1} parent=1 // pred_check
      _
    $region27: #{gfups_forward.1} parent=1 // pred_check_branch
      %107 = sbr.rel (0) target = $region29
    $region28: #{gfups_forward.1} parent=1 // pred_region
      _
    $region29: #{gfups_forward.1} parent=1 // pred_fallthru
      _
    %108 = vsyncpa [#allocation4], 1

</llo_original>
